<compile_context>
chip_gen: v5e
topology: v5e:2x2
jax: 0.10.0
libtpu: 0.0.40
codegen_flags: <defaults>
</compile_context>

<pallas_src>
import functools

import jax
import jax.numpy as jnp
from jax.experimental import pallas as pl
from jax.experimental.pallas import tpu as pltpu


def _round_up(x, m):
    return ((x + m - 1) // m) * m


def _gaussian_projection_kernel(x_ref, w1_ref, b1_ref, w2m_ref, b2m_ref,
                                w2s_ref, b2s_ref, mean_ref, log_std_ref,
                                *, mm_dtype):
    # Cast x in-kernel (avoids a separate XLA astype pass over x in HBM).
    x = x_ref[...].astype(mm_dtype)

    # Layer 1 (fused mean|std hidden, zero-padded to 128 lanes):
    #   h = relu(x @ [w1m | w1s | 0] + [b1m | b1s | 0])
    h = jnp.dot(x, w1_ref[...], preferred_element_type=jnp.float32)
    h = jnp.maximum(h + b1_ref[...], 0.0)          # (1, 128) bias broadcasts on VPU

    # Dropout(0.3): identity at inference.

    # Layer 2: two small matmuls against hidden-padded weights (zero rows in the
    # "other" half), each feeding its own output ref -> no wrapper slicing.
    h = h.astype(mm_dtype)
    mean = jnp.dot(h, w2m_ref[...], preferred_element_type=jnp.float32)
    log_std = jnp.dot(h, w2s_ref[...], preferred_element_type=jnp.float32)
    mean_ref[...] = (mean + b2m_ref[...]).astype(mean_ref.dtype)
    log_std_ref[...] = (log_std + b2s_ref[...]).astype(log_std_ref.dtype)


def gaussian_projection(x, params, *, tile_n=8192, compute_dtype=None):
    """x: (N, input_dim). params: dict of weights/biases (see init_params)."""
    n, input_dim = x.shape
    hidden = params["w1_mean"].shape[1]
    out_dim = params["w2_mean"].shape[1]
    out_dtype = x.dtype
    mm_dtype = compute_dtype if compute_dtype is not None else x.dtype

    # ---- pack fused, lane-padded weights once in the wrapper (grid-resident,
    #      so padding the hidden dim to a 128-lane multiple is free) ----
    h2 = 2 * hidden
    h_pad = max(128, _round_up(h2, 128))

    w1 = jnp.zeros((input_dim, h_pad), mm_dtype)
    w1 = w1.at[:, :hidden].set(params["w1_mean"].astype(mm_dtype))
    w1 = w1.at[:, hidden:h2].set(params["w1_std"].astype(mm_dtype))
    b1 = jnp.zeros((1, h_pad), jnp.float32)
    b1 = b1.at[:, :hidden].set(params["b1_mean"].astype(jnp.float32))
    b1 = b1.at[:, hidden:h2].set(params["b1_std"].astype(jnp.float32))

    w2m = jnp.zeros((h_pad, out_dim), mm_dtype)
    w2m = w2m.at[:hidden, :].set(params["w2_mean"].astype(mm_dtype))
    w2s = jnp.zeros((h_pad, out_dim), mm_dtype)
    w2s = w2s.at[hidden:h2, :].set(params["w2_std"].astype(mm_dtype))
    b2m = params["b2_mean"].astype(jnp.float32)
    b2s = params["b2_std"].astype(jnp.float32)

    # ---- batch tiling: big tiles (amortize per-step overhead), but capped at
    #      ~n/2 so v7x's two TensorCores both get work; multiple of 8 sublanes.
    #      Non-divisible n is handled by Pallas's masked partial trailing block.
    tile = max(8, min(_round_up(tile_n, 8), _round_up(pl.cdiv(n, 2), 8)))
    grid = (pl.cdiv(n, tile),)

    kernel = functools.partial(_gaussian_projection_kernel, mm_dtype=mm_dtype)

    mean, log_std = pl.pallas_call(
        kernel,
        out_shape=(
            jax.ShapeDtypeStruct((n, out_dim), out_dtype),
            jax.ShapeDtypeStruct((n, out_dim), out_dtype),
        ),
        grid=grid,
        in_specs=[
            pl.BlockSpec((tile, input_dim), lambda i: (i, 0)),   # x tile (streamed)
            pl.BlockSpec((input_dim, h_pad), lambda i: (0, 0)),  # W1 fused (resident)
            pl.BlockSpec((1, h_pad), lambda i: (0, 0)),          # b1 fused
            pl.BlockSpec((h_pad, out_dim), lambda i: (0, 0)),    # W2 mean (resident)
            pl.BlockSpec((1, out_dim), lambda i: (0, 0)),        # b2 mean
            pl.BlockSpec((h_pad, out_dim), lambda i: (0, 0)),    # W2 std (resident)
            pl.BlockSpec((1, out_dim), lambda i: (0, 0)),        # b2 std
        ],
        out_specs=(
            pl.BlockSpec((tile, out_dim), lambda i: (i, 0)),     # mean
            pl.BlockSpec((tile, out_dim), lambda i: (i, 0)),     # log_std
        ),
        compiler_params=pltpu.CompilerParams(
            dimension_semantics=("parallel",),        # megacore on v7x
            vmem_limit_bytes=32 * 1024 * 1024),       # headroom for big tiles
    )(x, w1, b1, w2m, b2m, w2s, b2s)
    return mean, log_std


def init_params(key, input_dim, output_dim, hidden_dim=32, dtype=jnp.float32):
    """Deterministic synthetic init (uniform, PyTorch-Linear-like bounds)."""
    ks = jax.random.split(key, 8)

    def lin(kw, kb, fan_in, fan_out):
        bound = 1.0 / jnp.sqrt(fan_in)
        w = jax.random.uniform(kw, (fan_in, fan_out), dtype, -bound, bound)
        b = jax.random.uniform(kb, (1, fan_out), dtype, -bound, bound)
        return w, b

    w1m, b1m = lin(ks[0], ks[1], input_dim, hidden_dim)
    w2m, b2m = lin(ks[2], ks[3], hidden_dim, output_dim)
    w1s, b1s = lin(ks[4], ks[5], input_dim, hidden_dim)
    w2s, b2s = lin(ks[6], ks[7], hidden_dim, output_dim)
    return {
        "w1_mean": w1m, "b1_mean": b1m, "w2_mean": w2m, "b2_mean": b2m,
        "w1_std": w1s, "b1_std": b1s, "w2_std": w2s, "b2_std": b2s,
    }


def _reference(x, p):
    hm = jnp.maximum(x @ p["w1_mean"] + p["b1_mean"], 0.0)
    mean = hm @ p["w2_mean"] + p["b2_mean"]
    hs = jnp.maximum(x @ p["w1_std"] + p["b1_std"], 0.0)
    log_std = hs @ p["w2_std"] + p["b2_std"]
    return mean, log_std


if __name__ == "__main__":
    key = jax.random.PRNGKey(0)
    k_x, k_x2, k_p = jax.random.split(key, 3)

    input_dim, hidden_dim, output_dim = 16, 32, 8
    params = init_params(k_p, input_dim, output_dim, hidden_dim)

    # Case 1: small batch, exact f32 check (single grid step).
    x = jax.random.normal(k_x, (8, input_dim), dtype=jnp.float32)
    fn = jax.jit(functools.partial(gaussian_projection, tile_n=8192))
    mean, log_std = fn(x, params)
    jax.block_until_ready((mean, log_std))
    ref_mean, ref_log_std = _reference(x, params)
    assert mean.shape == (8, output_dim) and log_std.shape == (8, output_dim)
    assert jnp.allclose(mean, ref_mean, atol=1e-5, rtol=1e-5)
    assert jnp.allclose(log_std, ref_log_std, atol=1e-5, rtol=1e-5)

    # Case 2: batch not a multiple of the tile (and not of 8) ->
    # exercises the masked partial trailing block (no wrapper padding).
    x2 = jax.random.normal(k_x2, (20, input_dim), dtype=jnp.float32)
    fn2 = jax.jit(functools.partial(gaussian_projection, tile_n=16))
    mean2, log_std2 = fn2(x2, params)
    jax.block_until_ready((mean2, log_std2))
    ref_mean2, ref_log_std2 = _reference(x2, params)
    assert mean2.shape == (20, output_dim)
    assert jnp.allclose(mean2, ref_mean2, atol=1e-5, rtol=1e-5)
    assert jnp.allclose(log_std2, ref_log_std2, atol=1e-5, rtol=1e-5)

    # Case 3: bf16 matmul operands (in-kernel cast of x), loose tolerance.
    fn_bf16 = jax.jit(functools.partial(
        gaussian_projection, tile_n=8192, compute_dtype=jnp.bfloat16))
    mean_b, log_std_b = fn_bf16(x, params)
    jax.block_until_ready((mean_b, log_std_b))
    assert jnp.allclose(mean_b, ref_mean, atol=1e-1, rtol=1e-1)
    assert jnp.allclose(log_std_b, ref_log_std, atol=1e-1, rtol=1e-1)

    print("KERNEL_OK")
</pallas_src>

<mosaic_0001>
module attributes {stable_mosaic.version = 11 : i64} {
  func.func @_gaussian_projection_kernel(%arg0: i32, %arg1: memref<8x16xf32, #tpu.memory_space<vmem>>, %arg2: memref<16x128xf32, #tpu.memory_space<vmem>>, %arg3: memref<1x128xf32, #tpu.memory_space<vmem>>, %arg4: memref<128x8xf32, #tpu.memory_space<vmem>>, %arg5: memref<1x8xf32, #tpu.memory_space<vmem>>, %arg6: memref<128x8xf32, #tpu.memory_space<vmem>>, %arg7: memref<1x8xf32, #tpu.memory_space<vmem>>, %arg8: memref<8x8xf32, #tpu.memory_space<vmem>>, %arg9: memref<8x8xf32, #tpu.memory_space<vmem>>) attributes {dimension_semantics = [#tpu.dimension_semantics<parallel>], iteration_bounds = array<i64: 1>, scalar_prefetch = 0 : i64, scratch_operands = 0 : i64, tpu.core_type = #tpu.core_type<tc>, window_params = [{transform_indices = @transform_0, window_bounds = array<i64: 8, 16>}, {pipeline_mode = #tpu.pipeline_mode<synchronous>, transform_indices = @transform_1, window_bounds = array<i64: 16, 128>}, {pipeline_mode = #tpu.pipeline_mode<synchronous>, transform_indices = @transform_2, window_bounds = array<i64: 1, 128>}, {pipeline_mode = #tpu.pipeline_mode<synchronous>, transform_indices = @transform_3, window_bounds = array<i64: 128, 8>}, {pipeline_mode = #tpu.pipeline_mode<synchronous>, transform_indices = @transform_4, window_bounds = array<i64: 1, 8>}, {pipeline_mode = #tpu.pipeline_mode<synchronous>, transform_indices = @transform_5, window_bounds = array<i64: 128, 8>}, {pipeline_mode = #tpu.pipeline_mode<synchronous>, transform_indices = @transform_6, window_bounds = array<i64: 1, 8>}, {transform_indices = @transform_7, window_bounds = array<i64: 8, 8>}, {transform_indices = @transform_8, window_bounds = array<i64: 8, 8>}]} {
    %c0 = arith.constant 0 : index
    %c0_0 = arith.constant 0 : index
    %0 = vector.load %arg1[%c0, %c0_0] : memref<8x16xf32, #tpu.memory_space<vmem>>, vector<8x16xf32>
    %c0_1 = arith.constant 0 : index
    %c0_2 = arith.constant 0 : index
    %1 = vector.load %arg2[%c0_1, %c0_2] : memref<16x128xf32, #tpu.memory_space<vmem>>, vector<16x128xf32>
    %cst = arith.constant dense<0.000000e+00> : vector<8x128xf32>
    %2 = tpu.matmul %0, %1, %cst {dimension_numbers = #tpu.dot_dimension_numbers<[1], [0], [0], [1], [0, 0, 1, 1], [], []>} : vector<8x16xf32>, vector<16x128xf32>, vector<8x128xf32> -> vector<8x128xf32>
    %c0_3 = arith.constant 0 : index
    %c0_4 = arith.constant 0 : index
    %3 = vector.load %arg3[%c0_3, %c0_4] : memref<1x128xf32, #tpu.memory_space<vmem>>, vector<1x128xf32>
    %4 = vector.broadcast %3 : vector<1x128xf32> to vector<8x128xf32>
    %5 = arith.addf %2, %4 : vector<8x128xf32>
    %cst_5 = arith.constant 0.000000e+00 : f32
    %6 = vector.broadcast %cst_5 : f32 to vector<8x128xf32>
    %7 = arith.maximumf %5, %6 : vector<8x128xf32>
    %c0_6 = arith.constant 0 : index
    %c0_7 = arith.constant 0 : index
    %8 = vector.load %arg4[%c0_6, %c0_7] : memref<128x8xf32, #tpu.memory_space<vmem>>, vector<128x8xf32>
    %cst_8 = arith.constant dense<0.000000e+00> : vector<8x8xf32>
    %9 = tpu.matmul %7, %8, %cst_8 {dimension_numbers = #tpu.dot_dimension_numbers<[1], [0], [0], [1], [0, 0, 1, 1], [], []>} : vector<8x128xf32>, vector<128x8xf32>, vector<8x8xf32> -> vector<8x8xf32>
    %c0_9 = arith.constant 0 : index
    %c0_10 = arith.constant 0 : index
    %10 = vector.load %arg6[%c0_9, %c0_10] : memref<128x8xf32, #tpu.memory_space<vmem>>, vector<128x8xf32>
    %cst_11 = arith.constant dense<0.000000e+00> : vector<8x8xf32>
    %11 = tpu.matmul %7, %10, %cst_11 {dimension_numbers = #tpu.dot_dimension_numbers<[1], [0], [0], [1], [0, 0, 1, 1], [], []>} : vector<8x128xf32>, vector<128x8xf32>, vector<8x8xf32> -> vector<8x8xf32>
    %c0_12 = arith.constant 0 : index
    %c0_13 = arith.constant 0 : index
    %12 = vector.load %arg5[%c0_12, %c0_13] : memref<1x8xf32, #tpu.memory_space<vmem>>, vector<1x8xf32>
    %13 = vector.broadcast %12 : vector<1x8xf32> to vector<8x8xf32>
    %14 = arith.addf %9, %13 : vector<8x8xf32>
    %c0_14 = arith.constant 0 : index
    %c0_15 = arith.constant 0 : index
    %15 = vector.load %arg8[%c0_14, %c0_15] : memref<8x8xf32, #tpu.memory_space<vmem>>, vector<8x8xf32>
    tpu.vector_store %arg8[%c0_14, %c0_15], %14 {strides = array<i32>} : memref<8x8xf32, #tpu.memory_space<vmem>>, vector<8x8xf32>,
    %c0_16 = arith.constant 0 : index
    %c0_17 = arith.constant 0 : index
    %16 = vector.load %arg7[%c0_16, %c0_17] : memref<1x8xf32, #tpu.memory_space<vmem>>, vector<1x8xf32>
    %17 = vector.broadcast %16 : vector<1x8xf32> to vector<8x8xf32>
    %18 = arith.addf %11, %17 : vector<8x8xf32>
    %c0_18 = arith.constant 0 : index
    %c0_19 = arith.constant 0 : index
    %19 = vector.load %arg9[%c0_18, %c0_19] : memref<8x8xf32, #tpu.memory_space<vmem>>, vector<8x8xf32>
    tpu.vector_store %arg9[%c0_18, %c0_19], %18 {strides = array<i32>} : memref<8x8xf32, #tpu.memory_space<vmem>>, vector<8x8xf32>,
    return
  }
  func.func @transform_0(%arg0: i32) -> (i32, i32) {
    %c0_i32 = arith.constant 0 : i32
    %c0_i32_0 = arith.constant 0 : i32
    return %arg0, %c0_i32 : i32, i32
  }
  func.func @transform_1(%arg0: i32) -> (i32, i32) {
    %c0_i32 = arith.constant 0 : i32
    %c0_i32_0 = arith.constant 0 : i32
    %c0_i32_1 = arith.constant 0 : i32
    return %c0_i32, %c0_i32_0 : i32, i32
  }
  func.func @transform_2(%arg0: i32) -> (i32, i32) {
    %c0_i32 = arith.constant 0 : i32
    %c0_i32_0 = arith.constant 0 : i32
    %c0_i32_1 = arith.constant 0 : i32
    return %c0_i32, %c0_i32_0 : i32, i32
  }
  func.func @transform_3(%arg0: i32) -> (i32, i32) {
    %c0_i32 = arith.constant 0 : i32
    %c0_i32_0 = arith.constant 0 : i32
    %c0_i32_1 = arith.constant 0 : i32
    return %c0_i32, %c0_i32_0 : i32, i32
  }
  func.func @transform_4(%arg0: i32) -> (i32, i32) {
    %c0_i32 = arith.constant 0 : i32
    %c0_i32_0 = arith.constant 0 : i32
    %c0_i32_1 = arith.constant 0 : i32
    return %c0_i32, %c0_i32_0 : i32, i32
  }
  func.func @transform_5(%arg0: i32) -> (i32, i32) {
    %c0_i32 = arith.constant 0 : i32
    %c0_i32_0 = arith.constant 0 : i32
    %c0_i32_1 = arith.constant 0 : i32
    return %c0_i32, %c0_i32_0 : i32, i32
  }
  func.func @transform_6(%arg0: i32) -> (i32, i32) {
    %c0_i32 = arith.constant 0 : i32
    %c0_i32_0 = arith.constant 0 : i32
    %c0_i32_1 = arith.constant 0 : i32
    return %c0_i32, %c0_i32_0 : i32, i32
  }
  func.func @transform_7(%arg0: i32) -> (i32, i32) {
    %c0_i32 = arith.constant 0 : i32
    %c0_i32_0 = arith.constant 0 : i32
    return %arg0, %c0_i32 : i32, i32
  }
  func.func @transform_8(%arg0: i32) -> (i32, i32) {
    %c0_i32 = arith.constant 0 : i32
    %c0_i32_0 = arith.constant 0 : i32
    return %arg0, %c0_i32 : i32, i32
  }
}

</mosaic_0001>

<llo_original>
// kernel: gaussian_projection.1
$region0: #{gaussian_projection.1}
  #allocation0 [shape = 'u32[]', space=smem, size = 0x4, offset = 0x4, fixed_abs, tag = 'smem constant byte address 0x4 - core index']
  #allocation1 [shape = 'u32[72,128]{1,0:T(1,128)}', space=vmem, size = 0x9000, scoped, tag = 'internal scratch']
  %s0 = inlined_call_operand.vmem [shape: f32[8,16], index: 0, kind: input, shape index: {}]
  %s1 = inlined_call_operand.vmem [shape: f32[16,128], index: 1, kind: input, shape index: {}]
  %s2 = inlined_call_operand.vmem [shape: f32[1,128], index: 2, kind: input, shape index: {}]
  %s3 = inlined_call_operand.vmem [shape: f32[128,8], index: 3, kind: input, shape index: {}]
  %s4 = inlined_call_operand.vmem [shape: f32[1,8], index: 4, kind: input, shape index: {}]
  %s5 = inlined_call_operand.vmem [shape: f32[128,8], index: 5, kind: input, shape index: {}]
  %s6 = inlined_call_operand.vmem [shape: f32[1,8], index: 6, kind: input, shape index: {}]
  %s7 = inlined_call_operand.hbm [shape: f32[8,8], index: 7, kind: output, shape index: {0}]
  %s8 = inlined_call_operand.hbm [shape: f32[8,8], index: 8, kind: output, shape index: {1}]
  %9 = xla_tuple %s7, %s8
  %s10 = sld [smem:[#allocation0]]
  $region46: #{gaussian_projection.1} parent=0
    _
  %s12 = ssub.s32 1, %s10
  %s13 = scalar_select 0, %s12, %s10
  $region1: #{gaussian_projection.1} parent=0
    #allocation2 [shape = 'u8[4096]{0}', space=vmem, size = 0x1000, scoped, tag = 'output window, operand 0, single buffered']
    #allocation3 [shape = 's32[1]{0}', space=sflag, size = 0x4, scoped, tag = 'scoped memory for gaussian_projection.1']
    #allocation4 [shape = 'u8[4096]{0}', space=vmem, size = 0x1000, scoped, tag = 'output window, operand 1, single buffered']
    #allocation5 [shape = 's32[1]{0}', space=sflag, size = 0x4, scoped, tag = 'scoped memory for gaussian_projection.1']
    %14 = vsyncpa [#allocation3], 0
    %15 = vsyncpa [#allocation5], 0
    // Predicated region
    $region2: #{gaussian_projection.1} parent=1 // pred_check
      _
    $region3: #{gaussian_projection.1} parent=1 // pred_check_branch
      %17 = sbr.rel (0) target = $region5
    $region4: #{gaussian_projection.1} parent=1 // pred_region
      _
    $region5: #{gaussian_projection.1} parent=1 // pred_fallthru
      _
    // Predicated region
    $region6: #{gaussian_projection.1} parent=1 // pred_check
      _
    $region7: #{gaussian_projection.1} parent=1 // pred_check_branch
      %19 = sbr.rel (0) target = $region9
    $region8: #{gaussian_projection.1} parent=1 // pred_region
      _
    $region9: #{gaussian_projection.1} parent=1 // pred_fallthru
      _
    // Predicated region
    $region10: #{gaussian_projection.1} parent=1 // pred_check
      _
    $region11: #{gaussian_projection.1} parent=1 // pred_check_branch
      %21 = sbr.rel (0) target = $region13
    $region12: #{gaussian_projection.1} parent=1 // pred_region
      _
    $region13: #{gaussian_projection.1} parent=1 // pred_fallthru
      _
    // Predicated region
    $region14: #{gaussian_projection.1} parent=1 // pred_check
      _
    $region15: #{gaussian_projection.1} parent=1 // pred_check_branch
      %23 = sbr.rel (0) target = $region17
    $region16: #{gaussian_projection.1} parent=1 // pred_region
      _
    $region17: #{gaussian_projection.1} parent=1 // pred_fallthru
      _
    // Predicated region
    $region18: #{gaussian_projection.1} parent=1 // pred_check
      _
    $region19: #{gaussian_projection.1} parent=1 // pred_check_branch
      %25 = sbr.rel (0) target = $region21
    $region20: #{gaussian_projection.1} parent=1 // pred_region
      _
    $region21: #{gaussian_projection.1} parent=1 // pred_fallthru
      _
    // Predicated region
    $region22: #{gaussian_projection.1} parent=1 // pred_check
      _
    $region23: #{gaussian_projection.1} parent=1 // pred_check_branch
      %27 = sbr.rel (0) target = $region25
    $region24: #{gaussian_projection.1} parent=1 // pred_region
      _
    $region25: #{gaussian_projection.1} parent=1 // pred_fallthru
      _
    // Predicated region
    $region26: #{gaussian_projection.1} parent=1 // pred_check
      _
    $region27: #{gaussian_projection.1} parent=1 // pred_check_branch
      %29 = sbr.rel (0) target = $region29
    $region28: #{gaussian_projection.1} parent=1 // pred_region
      _
    $region29: #{gaussian_projection.1} parent=1 // pred_fallthru
      _
    %v30 = vld [vmem:[%s0] sm:$0xff]
    %v31 = vld [vmem:[%s1] sm:$0xff]
    %v32 = vld [vmem:[%s1 + $0x8] sm:$0xff]
    %v33 = vld [vmem:[%s2] sm:$0x1]
    %v35 = vperm.slane %v33, 0
    %vm37 = vcmask 130048
    %v39 = vsel %vm37, %v30, 0
    %41 = vmatpush.msra.mxu0 0.0
    %42 = vmatpush.msra.mxu0 0.0
    %43 = vmatpush.msra.mxu0 0.0
    %44 = vmatpush.msra.mxu0 0.0
    %45 = vmatpush.msra.mxu0 0.0
    %46 = vmatpush.msra.mxu0 0.0
    %47 = vmatpush.msra.mxu0 0.0
    %48 = vmatpush.msra.mxu0 0.0
    %49 = vmatpush.msra.mxu0 0.0
    %50 = vmatpush.msra.mxu0 0.0
    %51 = vmatpush.msra.mxu0 0.0
    %52 = vmatpush.msra.mxu0 0.0
    %53 = vmatpush.msra.mxu0 0.0
    %54 = vmatpush.msra.mxu0 0.0
    %55 = vmatpush.msra.mxu0 %v32
    %56 = vmatpush.msra.mxu0 %v31
    %57 = vmatmul.f32.gmra.mxu0 %v39
    %v58 = vpop.f32.mrf.mxu0
    %v59 = vadd.f32 %v35, %v58
    %60 = vdwg.mxu0
    %v61 = vmax.f32 %v59, 0.0
    %v62 = vld [vmem:[%s3] sm:$0xff]
    %v63 = vld [vmem:[%s3 + $0x8] sm:$0xff]
    %v64 = vld [vmem:[%s3 + $0x10] sm:$0xff]
    %v65 = vld [vmem:[%s3 + $0x18] sm:$0xff]
    %v66 = vld [vmem:[%s3 + $0x20] sm:$0xff]
    %v67 = vld [vmem:[%s3 + $0x28] sm:$0xff]
    %v68 = vld [vmem:[%s3 + $0x30] sm:$0xff]
    %v69 = vld [vmem:[%s3 + $0x38] sm:$0xff]
    %v70 = vld [vmem:[%s3 + $0x40] sm:$0xff]
    %v71 = vld [vmem:[%s3 + $0x48] sm:$0xff]
    %v72 = vld [vmem:[%s3 + $0x50] sm:$0xff]
    %v73 = vld [vmem:[%s3 + $0x58] sm:$0xff]
    %v74 = vld [vmem:[%s3 + $0x60] sm:$0xff]
    %v75 = vld [vmem:[%s3 + $0x68] sm:$0xff]
    %v76 = vld [vmem:[%s3 + $0x70] sm:$0xff]
    %v77 = vld [vmem:[%s3 + $0x78] sm:$0xff]
    %v78 = vld [vmem:[%s5] sm:$0xff]
    %v79 = vld [vmem:[%s5 + $0x8] sm:$0xff]
    %v80 = vld [vmem:[%s5 + $0x10] sm:$0xff]
    %v81 = vld [vmem:[%s5 + $0x18] sm:$0xff]
    %v82 = vld [vmem:[%s5 + $0x20] sm:$0xff]
    %v83 = vld [vmem:[%s5 + $0x28] sm:$0xff]
    %v84 = vld [vmem:[%s5 + $0x30] sm:$0xff]
    %v85 = vld [vmem:[%s5 + $0x38] sm:$0xff]
    %v86 = vld [vmem:[%s5 + $0x40] sm:$0xff]
    %v87 = vld [vmem:[%s5 + $0x48] sm:$0xff]
    %v88 = vld [vmem:[%s5 + $0x50] sm:$0xff]
    %v89 = vld [vmem:[%s5 + $0x58] sm:$0xff]
    %v90 = vld [vmem:[%s5 + $0x60] sm:$0xff]
    %v91 = vld [vmem:[%s5 + $0x68] sm:$0xff]
    %v92 = vld [vmem:[%s5 + $0x70] sm:$0xff]
    %v93 = vld [vmem:[%s5 + $0x78] sm:$0xff]
    %v94 = vld [vmem:[%s4] sm:$0x1]
    %v96 = vperm.slane %v94, 0
    %98 = vmatpush.msra.mxu0 %v77
    %99 = vmatpush.msra.mxu0 %v76
    %100 = vmatpush.msra.mxu0 %v75
    %101 = vmatpush.msra.mxu0 %v74
    %102 = vmatpush.msra.mxu0 %v73
    %103 = vmatpush.msra.mxu0 %v72
    %104 = vmatpush.msra.mxu0 %v71
    %105 = vmatpush.msra.mxu0 %v70
    %106 = vmatpush.msra.mxu0 %v69
    %107 = vmatpush.msra.mxu0 %v68
    %108 = vmatpush.msra.mxu0 %v67
    %109 = vmatpush.msra.mxu0 %v66
    %110 = vmatpush.msra.mxu0 %v65
    %111 = vmatpush.msra.mxu0 %v64
    %112 = vmatpush.msra.mxu0 %v63
    %113 = vmatpush.msra.mxu0 %v62
    %114 = vmatmul.f32.gmra.mxu0 %v61
    %v115 = vpop.f32.mrf.mxu0
    %v116 = vadd.f32 %v96, %v115
    %117 = vdwg.mxu0
    %vm118 = vcmask 64512
    %119 = vst.msk [vmem:[#allocation2] sm:$0xff] %vm118, %v116
    %v120 = vld [vmem:[%s6] sm:$0x1]
    %v122 = vperm.slane %v120, 0
    %124 = vmatpush.msra.mxu0 %v93
    %125 = vmatpush.msra.mxu0 %v92
    %126 = vmatpush.msra.mxu0 %v91
    %127 = vmatpush.msra.mxu0 %v90
    %128 = vmatpush.msra.mxu0 %v89
    %129 = vmatpush.msra.mxu0 %v88
    %130 = vmatpush.msra.mxu0 %v87
    %131 = vmatpush.msra.mxu0 %v86
    %132 = vmatpush.msra.mxu0 %v85
    %133 = vmatpush.msra.mxu0 %v84
    %134 = vmatpush.msra.mxu0 %v83
    %135 = vmatpush.msra.mxu0 %v82
    %136 = vmatpush.msra.mxu0 %v81
    %137 = vmatpush.msra.mxu0 %v80
    %138 = vmatpush.msra.mxu0 %v79
    %139 = vmatpush.msra.mxu0 %v78
    %140 = vmatmul.f32.gmra.mxu0 %v61
    %v141 = vpop.f32.mrf.mxu0
    %v142 = vadd.f32 %v122, %v141
    %143 = vdwg.mxu0
    %144 = vst.msk [vmem:[#allocation4] sm:$0xff] %vm118, %v142
    // Predicated region
    $region30: #{gaussian_projection.1} parent=1 // pred_check
      _
    $region31: #{gaussian_projection.1} parent=1 // pred_check_branch
      %146 = sbr.rel (0) target = $region33
    $region32: #{gaussian_projection.1} parent=1 // pred_region
      %148 = vsyncadd [#allocation3], 0
      %s150 = sshll.u32 [#allocation2], 4
      %s151 = int_to_ptr.vmem [resolvable:$true] %s150
      %s152 = sshll.u32 %s7, 4
      %s153 = int_to_ptr.hbm [resolvable:$true] %s152
      %155 = dma.vmem_to_hbm [thread:$0]  %s151, 128, %s153, [#allocation3]
    $region33: #{gaussian_projection.1} parent=1 // pred_fallthru
      _
    // Predicated region
    $region34: #{gaussian_projection.1} parent=1 // pred_check
      _
    $region35: #{gaussian_projection.1} parent=1 // pred_check_branch
      %157 = sbr.rel (0) target = $region37
    $region36: #{gaussian_projection.1} parent=1 // pred_region
      %159 = vsyncadd [#allocation5], 0
      %s161 = sshll.u32 [#allocation4], 4
      %s162 = int_to_ptr.vmem [resolvable:$true] %s161
      %s163 = sshll.u32 %s8, 4
      %s164 = int_to_ptr.hbm [resolvable:$true] %s163
      %166 = dma.vmem_to_hbm [thread:$0]  %s162, 128, %s164, [#allocation5]
    $region37: #{gaussian_projection.1} parent=1 // pred_fallthru
      _
    // Predicated region
    $region38: #{gaussian_projection.1} parent=1 // pred_check
      _
    $region39: #{gaussian_projection.1} parent=1 // pred_check_branch
      %168 = sbr.rel (0) target = $region41
    $region40: #{gaussian_projection.1} parent=1 // pred_region
      %170 = dma.done [#allocation3], 128
    $region41: #{gaussian_projection.1} parent=1 // pred_fallthru
      _
    // Predicated region
    $region42: #{gaussian_projection.1} parent=1 // pred_check
      _
    $region43: #{gaussian_projection.1} parent=1 // pred_check_branch
      %172 = sbr.rel (0) target = $region45
    $region44: #{gaussian_projection.1} parent=1 // pred_region
      %174 = dma.done [#allocation5], 128
    $region45: #{gaussian_projection.1} parent=1 // pred_fallthru
      _
    %175 = vsyncpa [#allocation3], 1
    %176 = vsyncpa [#allocation5], 1

</llo_original>
